<compile_context>
chip_gen: v5e
topology: v5e:2x2
jax: 0.10.0
libtpu: 0.0.40
codegen_flags: <defaults>
</compile_context>

<pallas_src>
import functools

import jax
import jax.numpy as jnp
from jax.experimental import pallas as pl
from jax.experimental.pallas import tpu as pltpu


def _convblock_kernel(x_ref, w_ref, bias_ref, alpha_ref, o_ref):
    # x_ref:     (C_in, T_HW)   lane-dense input tile
    # w_ref:     (C_out, C_in)  BN-scale-folded 1x1 conv weight
    # bias_ref:  (C_out, 1)     folded BN bias  = beta - mean * gamma/sqrt(var+eps)
    # alpha_ref: (C_out, 1)     PReLU per-channel slope
    # o_ref:     (C_out, T_HW)  lane-dense output tile
    #
    # 1x1 conv == small matmul; C_in/C_out may be tiny here, but jnp.dot stays correct
    # and scales to realistic channel counts (MXU).  Accumulate in f32.
    y = jnp.dot(w_ref[...], x_ref[...], preferred_element_type=jnp.float32)
    y = y + bias_ref[...]                              # folded BatchNorm (eval) bias
    alpha = alpha_ref[...]
    y = jnp.where(y >= 0, y, alpha * y)                # PReLU (f32 epilogue, bf16-safe on v5e)
    o_ref[...] = y.astype(o_ref.dtype)


@functools.partial(jax.jit,
                   static_argnames=("eps", "tile_hw", "compute_dtype", "out_dtype"))
def conv_block_forward(x_nchw, weight, gamma, beta, running_mean, running_var,
                       prelu_alpha, *, eps=1e-5, tile_hw=8192,
                       compute_dtype=None, out_dtype=None):
    """Fused 1x1-conv + BN(eval) + PReLU forward.

    x_nchw: (N, C_in, H, W)
    weight: (C_out, C_in, 1, 1)  (PyTorch Conv2d weight layout)
    compute_dtype: dtype for x / folded weight inside the kernel (e.g. jnp.bfloat16 on
        v6e/v7x to halve HBM read traffic).  Epilogue math stays f32.
    out_dtype: output dtype (default float32; set bf16 if the consumer allows).
    """
    N, C_in, H, W = x_nchw.shape
    C_out = weight.shape[0]
    HW = H * W

    in_dtype = x_nchw.dtype if compute_dtype is None else jnp.dtype(compute_dtype)
    o_dtype = jnp.float32 if out_dtype is None else jnp.dtype(out_dtype)

    # Fold BN into the weight (scale) and a per-channel bias.
    scale = gamma / jnp.sqrt(running_var + eps)                          # (C_out,)
    bias = (beta - running_mean * scale).reshape(C_out, 1).astype(jnp.float32)
    w_folded = (weight.reshape(C_out, C_in) * scale[:, None]).astype(in_dtype)
    alpha2 = prelu_alpha.reshape(C_out, 1).astype(jnp.float32)

    # NCHW -> (N, C_in, H*W): pure reshape, no HBM transpose pass.
    x = x_nchw.reshape(N, C_in, HW).astype(in_dtype)

    # Spatial tile: largest multiple of 128 <= tile_hw that is needed; pad H*W up to it.
    tile_hw = max(128, (int(tile_hw) // 128) * 128)
    t_hw = min(pl.cdiv(HW, 128) * 128, tile_hw)
    hw_p = pl.cdiv(HW, t_hw) * t_hw
    if hw_p != HW:
        x = jnp.pad(x, ((0, 0), (0, 0), (0, hw_p - HW)))

    grid = (N, hw_p // t_hw)

    out = pl.pallas_call(
        _convblock_kernel,
        out_shape=jax.ShapeDtypeStruct((N, C_out, hw_p), o_dtype),
        grid_spec=pltpu.PrefetchScalarGridSpec(
            num_scalar_prefetch=0,
            grid=grid,
            in_specs=[
                # batch dim squeezed out of the kernel view (None -> size-1, squeezed)
                pl.BlockSpec((None, C_in, t_hw), lambda n, j: (n, 0, j)),
                pl.BlockSpec((C_out, C_in), lambda n, j: (0, 0)),
                pl.BlockSpec((C_out, 1), lambda n, j: (0, 0)),
                pl.BlockSpec((C_out, 1), lambda n, j: (0, 0)),
            ],
            out_specs=pl.BlockSpec((None, C_out, t_hw), lambda n, j: (n, 0, j)),
        ),
        compiler_params=pltpu.CompilerParams(
            # Both grid axes independent -> shard across v7x's 2 TensorCores.
            dimension_semantics=("parallel", "parallel"),
            # Explicit scoped-VMEM budget with headroom; safe on v5e/v6e (128 MiB) and
            # v7x (64 MiB physical).  Tiles here are tiny (<1 MiB double-buffered).
            vmem_limit_bytes=32 * 1024 * 1024,
        ),
    )(x, w_folded, bias, alpha2)

    out = out[:, :, :HW].reshape(N, C_out, H, W)   # (N, C_out, H*W) -> NCHW, reshape only
    return out


def _reference(x_nchw, weight, gamma, beta, mean, var, alpha, eps=1e-5):
    # Pure-JAX reference for the same eval-mode forward.
    y = jnp.einsum("nchw,oc->nohw", x_nchw,
                   weight.reshape(weight.shape[0], weight.shape[1]))
    scale = gamma / jnp.sqrt(var + eps)
    bias = beta - mean * scale
    y = y * scale[None, :, None, None] + bias[None, :, None, None]
    a = alpha[None, :, None, None]
    return jnp.where(y >= 0, y, a * y)


if __name__ == "__main__":
    key = jax.random.PRNGKey(0)
    k_x, k_w, k_g, k_b, k_m, k_v, k_a = jax.random.split(key, 7)

    N, C_in, H, W = 2, 4, 16, 16
    C_out = 8

    x = jax.random.normal(k_x, (N, C_in, H, W), dtype=jnp.float32)
    weight = jax.random.normal(k_w, (C_out, C_in, 1, 1), dtype=jnp.float32) * 0.1
    gamma = jax.random.normal(k_g, (C_out,), dtype=jnp.float32) * 0.1 + 1.0
    beta = jax.random.normal(k_b, (C_out,), dtype=jnp.float32) * 0.1
    running_mean = jax.random.normal(k_m, (C_out,), dtype=jnp.float32) * 0.1
    running_var = jax.random.uniform(k_v, (C_out,), dtype=jnp.float32,
                                     minval=0.5, maxval=1.5)
    prelu_alpha = jnp.full((C_out,), 0.25, dtype=jnp.float32) + \
        jax.random.normal(k_a, (C_out,), dtype=jnp.float32) * 0.01

    ref = _reference(x, weight, gamma, beta, running_mean, running_var, prelu_alpha)

    # f32 path (tight check).
    out = conv_block_forward(x, weight, gamma, beta, running_mean, running_var,
                             prelu_alpha)
    out = jax.block_until_ready(out)
    assert out.shape == (N, C_out, H, W), out.shape
    assert jnp.allclose(out, ref, atol=1e-4, rtol=1e-4), \
        float(jnp.max(jnp.abs(out - ref)))

    # bf16 input/weight path (halved HBM read traffic on v6e/v7x); relaxed tolerance.
    out_bf16 = conv_block_forward(x, weight, gamma, beta, running_mean, running_var,
                                  prelu_alpha, compute_dtype=jnp.bfloat16)
    out_bf16 = jax.block_until_ready(out_bf16)
    assert out_bf16.shape == (N, C_out, H, W), out_bf16.shape
    assert jnp.allclose(out_bf16.astype(jnp.float32), ref, atol=3e-2, rtol=3e-2), \
        float(jnp.max(jnp.abs(out_bf16.astype(jnp.float32) - ref)))

    print("KERNEL_OK")
</pallas_src>

<mosaic_0001>
module attributes {stable_mosaic.version = 11 : i64} {
  func.func @_convblock_kernel(%arg0: i32, %arg1: i32, %arg2: memref<1x4x256xf32, #tpu.memory_space<vmem>>, %arg3: memref<8x4xf32, #tpu.memory_space<vmem>>, %arg4: memref<8x1xf32, #tpu.memory_space<vmem>>, %arg5: memref<8x1xf32, #tpu.memory_space<vmem>>, %arg6: memref<1x8x256xf32, #tpu.memory_space<vmem>>) attributes {dimension_semantics = [#tpu.dimension_semantics<parallel>, #tpu.dimension_semantics<parallel>], iteration_bounds = array<i64: 2, 1>, scalar_prefetch = 0 : i64, scratch_operands = 0 : i64, tpu.core_type = #tpu.core_type<tc>, window_params = [{transform_indices = @transform_0, window_bounds = array<i64: 1, 4, 256>}, {pipeline_mode = #tpu.pipeline_mode<synchronous>, transform_indices = @transform_1, window_bounds = array<i64: 8, 4>}, {pipeline_mode = #tpu.pipeline_mode<synchronous>, transform_indices = @transform_2, window_bounds = array<i64: 8, 1>}, {pipeline_mode = #tpu.pipeline_mode<synchronous>, transform_indices = @transform_3, window_bounds = array<i64: 8, 1>}, {transform_indices = @transform_4, window_bounds = array<i64: 1, 8, 256>}]} {
    %c0 = arith.constant 0 : index
    %c0_0 = arith.constant 0 : index
    %0 = vector.load %arg3[%c0, %c0_0] : memref<8x4xf32, #tpu.memory_space<vmem>>, vector<8x4xf32>
    %c0_1 = arith.constant 0 : index
    %c0_2 = arith.constant 0 : index
    %c0_3 = arith.constant 0 : index
    %1 = vector.load %arg2[%c0_1, %c0_2, %c0_3] : memref<1x4x256xf32, #tpu.memory_space<vmem>>, vector<1x4x256xf32>
    %2 = vector.shape_cast %1 : vector<1x4x256xf32> to vector<4x256xf32>
    %cst = arith.constant dense<0.000000e+00> : vector<8x256xf32>
    %3 = tpu.matmul %0, %2, %cst {dimension_numbers = #tpu.dot_dimension_numbers<[1], [0], [0], [1], [0, 0, 1, 1], [], []>} : vector<8x4xf32>, vector<4x256xf32>, vector<8x256xf32> -> vector<8x256xf32>
    %c0_4 = arith.constant 0 : index
    %c0_5 = arith.constant 0 : index
    %4 = vector.load %arg4[%c0_4, %c0_5] : memref<8x1xf32, #tpu.memory_space<vmem>>, vector<8x1xf32>
    %5 = vector.broadcast %4 : vector<8x1xf32> to vector<8x256xf32>
    %6 = arith.addf %3, %5 : vector<8x256xf32>
    %c0_6 = arith.constant 0 : index
    %c0_7 = arith.constant 0 : index
    %7 = vector.load %arg5[%c0_6, %c0_7] : memref<8x1xf32, #tpu.memory_space<vmem>>, vector<8x1xf32>
    %cst_8 = arith.constant 0.000000e+00 : f32
    %8 = vector.broadcast %cst_8 : f32 to vector<8x256xf32>
    %9 = arith.cmpf oge, %6, %8 : vector<8x256xf32>
    %10 = vector.broadcast %7 : vector<8x1xf32> to vector<8x256xf32>
    %11 = arith.mulf %10, %6 : vector<8x256xf32>
    %12 = arith.select %9, %6, %11 : vector<8x256xi1>, vector<8x256xf32>
    %c0_9 = arith.constant 0 : index
    %c0_10 = arith.constant 0 : index
    %c0_11 = arith.constant 0 : index
    %13 = vector.load %arg6[%c0_9, %c0_10, %c0_11] : memref<1x8x256xf32, #tpu.memory_space<vmem>>, vector<1x8x256xf32>
    %14 = vector.shape_cast %13 : vector<1x8x256xf32> to vector<8x256xf32>
    %15 = vector.shape_cast %12 : vector<8x256xf32> to vector<1x8x256xf32>
    tpu.vector_store %arg6[%c0_9, %c0_10, %c0_11], %15 {strides = array<i32>} : memref<1x8x256xf32, #tpu.memory_space<vmem>>, vector<1x8x256xf32>,
    return
  }
  func.func @transform_0(%arg0: i32, %arg1: i32) -> (i32, i32, i32) {
    %c0_i32 = arith.constant 0 : i32
    %c0_i32_0 = arith.constant 0 : i32
    return %arg0, %c0_i32, %arg1 : i32, i32, i32
  }
  func.func @transform_1(%arg0: i32, %arg1: i32) -> (i32, i32) {
    %c0_i32 = arith.constant 0 : i32
    %c0_i32_0 = arith.constant 0 : i32
    %c0_i32_1 = arith.constant 0 : i32
    return %c0_i32, %c0_i32_0 : i32, i32
  }
  func.func @transform_2(%arg0: i32, %arg1: i32) -> (i32, i32) {
    %c0_i32 = arith.constant 0 : i32
    %c0_i32_0 = arith.constant 0 : i32
    %c0_i32_1 = arith.constant 0 : i32
    return %c0_i32, %c0_i32_0 : i32, i32
  }
  func.func @transform_3(%arg0: i32, %arg1: i32) -> (i32, i32) {
    %c0_i32 = arith.constant 0 : i32
    %c0_i32_0 = arith.constant 0 : i32
    %c0_i32_1 = arith.constant 0 : i32
    return %c0_i32, %c0_i32_0 : i32, i32
  }
  func.func @transform_4(%arg0: i32, %arg1: i32) -> (i32, i32, i32) {
    %c0_i32 = arith.constant 0 : i32
    %c0_i32_0 = arith.constant 0 : i32
    return %arg0, %c0_i32, %arg1 : i32, i32, i32
  }
}

</mosaic_0001>

<llo_original>
// kernel: conv_block_forward.1
$region0: #{conv_block_forward.1}
  #allocation0 [shape = 'u32[]', space=smem, size = 0x4, offset = 0x4, fixed_abs, tag = 'smem constant byte address 0x4 - core index']
  #allocation1 [shape = 'u32[72,128]{1,0:T(1,128)}', space=vmem, size = 0x9000, scoped, tag = 'internal scratch']
  %s0 = inlined_call_operand.vmem [shape: f32[2,4,256], index: 0, kind: input, shape index: {}]
  %s1 = inlined_call_operand.vmem [shape: f32[8,4], index: 1, kind: input, shape index: {}]
  %s2 = inlined_call_operand.vmem [shape: f32[8,1], index: 2, kind: input, shape index: {}]
  %s3 = inlined_call_operand.vmem [shape: f32[8,1], index: 3, kind: input, shape index: {}]
  %s4 = inlined_call_operand.vmem [shape: f32[2,8,256], index: 4, kind: output, shape index: {}]
  %s5 = sld [smem:[#allocation0]]
  $region49: #{conv_block_forward.1} parent=0
    _
  %s7 = ssub.s32 1, %s5
  %s8 = scalar_select 0, %s7, %s5
  loop: start=0, step=1, limit=4
  $region2: #{conv_block_forward.1} parent=0 // loop_pre_header
    _
  $region3: #{conv_block_forward.1} parent=0 // loop_header
    %s10 = sphi 0, %s14
    %p11 = scmp.ge.s32.totalorder %s10, 4
    %s17 = sphi 0, %s29
    %s18 = sphi 0, %s25
    %s19 = sphi 0, %s17
    %s20 = sphi 0, %s18
    %s21 = sphi 0, %s19
    %s22 = sphi 0, %s20
    %s34 = sphi 0, %s36
    %s37 = sphi 0, %s34
    %s38 = sphi 0, %s37
    %s54 = sphi 0, %s38
    %s58 = sphi 0, %s58
    %s60 = sphi 0, %s58
    %s61 = sphi 0, %s60
    %s75 = sphi 0, %s61
    %s79 = sphi 0, %s79
    %s81 = sphi 0, %s79
    %s82 = sphi 0, %s81
    %s96 = sphi 0, %s82
    %s100 = sphi 0, %s100
    %s102 = sphi 0, %s100
    %s103 = sphi 0, %s102
    %s117 = sphi 0, %s103
    %s125 = sphi 0, %s127
    %s128 = sphi 0, %s125
    %s129 = sphi 0, %s128
    %s145 = sphi 0, %s129
  $region4: #{conv_block_forward.1} parent=0 // loop_header_branch
    %13 = sbr.rel (%p11) target = $region8
  $region5: #{conv_block_forward.1} parent=0 // loop_body
    %s15 = ssub.s32 %s10, 1
    %s16 = ssub.s32 %s10, 2
    %s23 = sadd.s32 1, %s18
    %p24 = scmp.ge.s32.totalorder %s23, 1
    %s25 = scalar_select %p24, 0, %s23
    %s26 = sadd.s32 1, %s17
    %s27 = scalar_select %p24, %s26, %s17
    %p28 = scmp.ge.s32.totalorder %s27, 2
    %s29 = scalar_select %p28, 0, %s27
    %s30 = ssub.s32 %s17, %s29
    %s31 = ssub.s32 %s18, %s25
    %s32 = sor.u32 %s30, %s31
    %p33 = scmp.eq.s32.totalorder %s32, 0
    %s35 = sadd.s32 %s34, 1
    %s36 = scalar_select %p33, %s34, %s35
    %p39 = pneg %p33
    %p40 = scmp.eq.s32.totalorder %s10, 1
    %p41 = por %p39, %p40
    %p42 = scmp.ne.s32.totalorder %s34, %s37
    %p43 = scmp.eq.s32.totalorder %s10, 0
    %p44 = por %p42, %p43
    %p45 = scmp.ne.s32.totalorder %s34, %s37
    %p46 = scmp.eq.s32.totalorder %s15, 1
    %p47 = por %p45, %p46
    %p48 = scmp.ne.s32.totalorder %s37, %s38
    %p49 = scmp.eq.s32.totalorder %s15, 0
    %p50 = por %p48, %p49
    %p51 = scmp.ne.s32.totalorder %s37, %s38
    %p52 = scmp.eq.s32.totalorder %s16, 1
    %p53 = por %p51, %p52
    %p55 = scmp.ne.s32.totalorder %s38, %s54
    %p56 = scmp.eq.s32.totalorder %s16, 0
    %p57 = por %p55, %p56
    %s59 = sadd.s32 %s58, 1
    %p62 = scmp.eq.s32.totalorder %s10, 1
    %p63 = scmp.ne.s32.totalorder %s58, %s60
    %p64 = scmp.eq.s32.totalorder %s10, 0
    %p65 = por %p63, %p64
    %p66 = scmp.ne.s32.totalorder %s58, %s60
    %p67 = scmp.eq.s32.totalorder %s15, 1
    %p68 = por %p66, %p67
    %p69 = scmp.ne.s32.totalorder %s60, %s61
    %p70 = scmp.eq.s32.totalorder %s15, 0
    %p71 = por %p69, %p70
    %p72 = scmp.ne.s32.totalorder %s60, %s61
    %p73 = scmp.eq.s32.totalorder %s16, 1
    %p74 = por %p72, %p73
    %p76 = scmp.ne.s32.totalorder %s61, %s75
    %p77 = scmp.eq.s32.totalorder %s16, 0
    %p78 = por %p76, %p77
    %s80 = sadd.s32 %s79, 1
    %p83 = scmp.eq.s32.totalorder %s10, 1
    %p84 = scmp.ne.s32.totalorder %s79, %s81
    %p85 = scmp.eq.s32.totalorder %s10, 0
    %p86 = por %p84, %p85
    %p87 = scmp.ne.s32.totalorder %s79, %s81
    %p88 = scmp.eq.s32.totalorder %s15, 1
    %p89 = por %p87, %p88
    %p90 = scmp.ne.s32.totalorder %s81, %s82
    %p91 = scmp.eq.s32.totalorder %s15, 0
    %p92 = por %p90, %p91
    %p93 = scmp.ne.s32.totalorder %s81, %s82
    %p94 = scmp.eq.s32.totalorder %s16, 1
    %p95 = por %p93, %p94
    %p97 = scmp.ne.s32.totalorder %s82, %s96
    %p98 = scmp.eq.s32.totalorder %s16, 0
    %p99 = por %p97, %p98
    %s101 = sadd.s32 %s100, 1
    %p104 = scmp.eq.s32.totalorder %s10, 1
    %p105 = scmp.ne.s32.totalorder %s100, %s102
    %p106 = scmp.eq.s32.totalorder %s10, 0
    %p107 = por %p105, %p106
    %p108 = scmp.ne.s32.totalorder %s100, %s102
    %p109 = scmp.eq.s32.totalorder %s15, 1
    %p110 = por %p108, %p109
    %p111 = scmp.ne.s32.totalorder %s102, %s103
    %p112 = scmp.eq.s32.totalorder %s15, 0
    %p113 = por %p111, %p112
    %p114 = scmp.ne.s32.totalorder %s102, %s103
    %p115 = scmp.eq.s32.totalorder %s16, 1
    %p116 = por %p114, %p115
    %p118 = scmp.ne.s32.totalorder %s103, %s117
    %p119 = scmp.eq.s32.totalorder %s16, 0
    %p120 = por %p118, %p119
    %s121 = ssub.s32 %s17, %s29
    %s122 = ssub.s32 %s18, %s25
    %s123 = sor.u32 %s121, %s122
    %p124 = scmp.eq.s32.totalorder %s123, 0
    %s126 = sadd.s32 %s125, 1
    %s127 = scalar_select %p124, %s125, %s126
    %p130 = pneg %p124
    %p131 = scmp.eq.s32.totalorder %s10, 1
    %p132 = por %p130, %p131
    %p133 = scmp.ne.s32.totalorder %s125, %s128
    %p134 = scmp.eq.s32.totalorder %s10, 0
    %p135 = por %p133, %p134
    %p136 = scmp.ne.s32.totalorder %s125, %s128
    %p137 = scmp.eq.s32.totalorder %s15, 1
    %p138 = por %p136, %p137
    %p139 = scmp.ne.s32.totalorder %s128, %s129
    %p140 = scmp.eq.s32.totalorder %s15, 0
    %p141 = por %p139, %p140
    %p142 = scmp.ne.s32.totalorder %s128, %s129
    %p143 = scmp.eq.s32.totalorder %s16, 1
    %p144 = por %p142, %p143
    %p146 = scmp.ne.s32.totalorder %s129, %s145
    %p147 = scmp.eq.s32.totalorder %s16, 0
    %p148 = por %p146, %p147
    %p149 = scmp.le.s32.totalorder 1, %s10
    %p150 = scmp.lt.s32.totalorder %s10, 3
    %p151 = pnand %p149, %p150
    %p152 = pneg %p151
    // Predicated region
    $region9: #{conv_block_forward.1} parent=5 // pred_check
      _
    $region10: #{conv_block_forward.1} parent=5 // pred_check_branch
      %154 = sbr.rel (%p151) target = $region12
    $region11: #{conv_block_forward.1} parent=5 // pred_region
      %s155 = ssub.s32 %s10, 1
      // Predicated region
      $region13: #{conv_block_forward.1} parent=11 // pred_check
        %p156 = pneg %p71
      $region14: #{conv_block_forward.1} parent=11 // pred_check_branch
        %158 = sbr.rel (%p156) target = $region16
      $region15: #{conv_block_forward.1} parent=11 // pred_region
        _
      $region16: #{conv_block_forward.1} parent=11 // pred_fallthru
        _
      // Predicated region
      $region17: #{conv_block_forward.1} parent=11 // pred_check
        %p159 = pneg %p92
      $region18: #{conv_block_forward.1} parent=11 // pred_check_branch
        %161 = sbr.rel (%p159) target = $region20
      $region19: #{conv_block_forward.1} parent=11 // pred_region
        _
      $region20: #{conv_block_forward.1} parent=11 // pred_fallthru
        _
      // Predicated region
      $region21: #{conv_block_forward.1} parent=11 // pred_check
        %p162 = pneg %p113
      $region22: #{conv_block_forward.1} parent=11 // pred_check_branch
        %164 = sbr.rel (%p162) target = $region24
      $region23: #{conv_block_forward.1} parent=11 // pred_region
        _
      $region24: #{conv_block_forward.1} parent=11 // pred_fallthru
        _
    $region12: #{conv_block_forward.1} parent=5 // pred_fallthru
      _
    %p165 = scmp.lt.s32.totalorder %s10, 2
    // Predicated region
    $region25: #{conv_block_forward.1} parent=5 // pred_check
      %p166 = pneg %p165
    $region26: #{conv_block_forward.1} parent=5 // pred_check_branch
      %168 = sbr.rel (%p166) target = $region28
    $region27: #{conv_block_forward.1} parent=5 // pred_region
      // Predicated region
      $region29: #{conv_block_forward.1} parent=27 // pred_check
        %p169 = pneg %p44
      $region30: #{conv_block_forward.1} parent=27 // pred_check_branch
        %171 = sbr.rel (%p169) target = $region32
      $region31: #{conv_block_forward.1} parent=27 // pred_region
        %s172 = smul.u32 2, %s18
        %p173 = scmp.lt.s32.totalorder %s17, 1
        %s174 = scalar_select %p173, %s17, 1
        %p175 = scmp.lt.s32.totalorder %s172, 1
        %s176 = scalar_select %p175, %s172, 1
        %s177 = smul.addr %s174, 2
        %s178 = sadd.s32 %s176, %s177
        %s179 = smul.addr %s178, 4
        %s180 = scalar_lea.vmem %s0, %s179
        %s181 = smul.u32 2, %s18
      $region32: #{conv_block_forward.1} parent=27 // pred_fallthru
        _
    $region28: #{conv_block_forward.1} parent=5 // pred_fallthru
      _
    %p182 = scmp.le.s32.totalorder 1, %s10
    %p183 = scmp.lt.s32.totalorder %s10, 3
    %p184 = pnand %p182, %p183
    %p185 = pneg %p184
    // Predicated region
    $region33: #{conv_block_forward.1} parent=5 // pred_check
      _
    $region34: #{conv_block_forward.1} parent=5 // pred_check_branch
      %187 = sbr.rel (%p184) target = $region36
    $region35: #{conv_block_forward.1} parent=5 // pred_region
      %s188 = ssub.s32 %s10, 1
      %s189 = smul.u32 2, %s20
      %p190 = scmp.lt.s32.totalorder %s19, 1
      %s191 = scalar_select %p190, %s19, 1
      %p192 = scmp.lt.s32.totalorder %s189, 1
      %s193 = scalar_select %p192, %s189, 1
      %s194 = smul.addr %s191, 2
      %s195 = sadd.s32 %s193, %s194
      %s196 = smul.addr %s195, 4
      %s197 = scalar_lea.vmem %s0, %s196
      %p198 = pneg %p50
      %p199 = pneg %p47
      %p200 = pneg %p71
      %p201 = pneg %p68
      %p202 = pneg %p92
      %p203 = pneg %p89
      %p204 = pneg %p113
      %p205 = pneg %p110
      %p206 = pneg %p141
      %p207 = pneg %p138
      %s208 = smul.u32 2, %s20
      %p209 = scmp.lt.s32.totalorder %s19, 1
      %s210 = scalar_select %p209, %s19, 1
      %p211 = scmp.lt.s32.totalorder %s208, 1
      %s212 = scalar_select %p211, %s208, 1
      %s213 = smul.addr %s210, 2
      %s214 = sadd.s32 %s212, %s213
      %s215 = smul.addr %s214, 8
      %s216 = scalar_lea.vmem %s4, %s215
      %s217 = smul.u32 2, %s20
      %p218 = scmp.lt.s32.totalorder %s19, 1
      %s219 = scalar_select %p218, %s19, 1
      %p220 = scmp.lt.s32.totalorder %s217, 1
      %s221 = scalar_select %p220, %s217, 1
      %s222 = smul.addr %s219, 2
      %s223 = sadd.s32 %s221, %s222
      %s224 = smul.addr %s223, 4
      %s225 = scalar_lea.vmem %s0, %s224
      %s226 = smul.u32 2, %s20
      %s227 = smul.u32 2, %s20
      %p228 = scmp.lt.s32.totalorder %s19, 1
      %s229 = scalar_select %p228, %s19, 1
      %p230 = scmp.lt.s32.totalorder %s227, 1
      %s231 = scalar_select %p230, %s227, 1
      %s232 = smul.addr %s229, 2
      %s233 = sadd.s32 %s231, %s232
      %s234 = smul.addr %s233, 8
      %s235 = scalar_lea.vmem %s4, %s234
      %s236 = smul.u32 2, %s20
      %v237 = vld [vmem:[%s1] sm:$0xff]
      %v238 = vld [vmem:[%s225] sm:$0xff]
      %v239 = vld [vmem:[%s2] sm:$0xff]
      %241 = vset.pattern.permute.xlu0 0
      %242 = vperm.xlu0 %241, %v239
      %v243 = vpop.permute.xlu0 %242
      %246 = vst [vmem:[#allocation1] ss:$2 sm:$0xff] %v238
      %v247 = vld.sshfl [vmem:[#allocation1] sm:$0xff pattern:$0x75316420]
      %v248 = vld.sshfl [vmem:[#allocation1 + $0x8] sm:$0xff pattern:$0x75316420]
      %vm249 = vcmask 31744
      %v251 = vsel %vm249, %v237, 0
      %vm253 = vcmask 1043456
      %v254 = vsel %vm253, %v247, 0
      %v256 = vsel %vm253, %v248, 0
      %258 = vmatpush.msra.mxu0 0.0
      %259 = vmatpush.msra.mxu0 0.0
      %260 = vmatpush.msra.mxu0 0.0
      %261 = vmatpush.msra.mxu0 0.0
      %262 = vmatpush.msra.mxu0 0.0
      %263 = vmatpush.msra.mxu0 0.0
      %264 = vmatpush.msra.mxu0 0.0
      %265 = vmatpush.msra.mxu0 0.0
      %266 = vmatpush.msra.mxu0 0.0
      %267 = vmatpush.msra.mxu0 0.0
      %268 = vmatpush.msra.mxu0 0.0
      %269 = vmatpush.msra.mxu0 0.0
      %270 = vmatpush.msra.mxu0 0.0
      %271 = vmatpush.msra.mxu0 0.0
      %272 = vmatpush.msra.mxu0 0.0
      %273 = vmatpush.msra.mxu0 %v254
      %274 = vmatmul.f32.gmra.mxu0 %v251
      %v275 = vpop.f32.mrf.mxu0
      %v276 = vadd.f32 %v243, %v275
      %277 = vdwg.mxu0
      %278 = vmatpush.msra.mxu0 0.0
      %279 = vmatpush.msra.mxu0 0.0
      %280 = vmatpush.msra.mxu0 0.0
      %281 = vmatpush.msra.mxu0 0.0
      %282 = vmatpush.msra.mxu0 0.0
      %283 = vmatpush.msra.mxu0 0.0
      %284 = vmatpush.msra.mxu0 0.0
      %285 = vmatpush.msra.mxu0 0.0
      %286 = vmatpush.msra.mxu0 0.0
      %287 = vmatpush.msra.mxu0 0.0
      %288 = vmatpush.msra.mxu0 0.0
      %289 = vmatpush.msra.mxu0 0.0
      %290 = vmatpush.msra.mxu0 0.0
      %291 = vmatpush.msra.mxu0 0.0
      %292 = vmatpush.msra.mxu0 0.0
      %293 = vmatpush.msra.mxu0 %v256
      %294 = vmatmul.f32.gmra.mxu0 %v251
      %v295 = vpop.f32.mrf.mxu0
      %v296 = vadd.f32 %v243, %v295
      %297 = vdwg.mxu0
      %v298 = vld [vmem:[%s3] sm:$0xff]
      %vm299 = vcmp.ge.f32.partialorder %v276, 0.0
      %vm300 = vcmp.ge.f32.partialorder %v296, 0.0
      %302 = vset.pattern.permute.xlu0 0
      %303 = vperm.xlu0 %302, %v298
      %v304 = vpop.permute.xlu0 %303
      %v306 = vmul.f32 %v304, %v276
      %v307 = vmul.f32 %v304, %v296
      %v308 = vsel %vm299, %v276, %v306
      %v309 = vsel %vm300, %v296, %v307
      %310 = vst [vmem:[%s235] sm:$0xff] %v308
      %311 = vst [vmem:[%s235 + $0x8] sm:$0xff] %v309
      %s312 = smul.u32 2, %s20
      %p313 = scmp.lt.s32.totalorder %s19, 1
      %s314 = scalar_select %p313, %s19, 1
      %p315 = scmp.lt.s32.totalorder %s312, 1
      %s316 = scalar_select %p315, %s312, 1
      %s317 = smul.addr %s314, 2
      %s318 = sadd.s32 %s316, %s317
      %s319 = smul.addr %s318, 8
      %s320 = scalar_lea.vmem %s4, %s319
      // Predicated region
      $region37: #{conv_block_forward.1} parent=35 // pred_check
        %p321 = pneg %p138
      $region38: #{conv_block_forward.1} parent=35 // pred_check_branch
        %323 = sbr.rel (%p321) target = $region40
      $region39: #{conv_block_forward.1} parent=35 // pred_region
        %s324 = smul.u32 2, %s20
      $region40: #{conv_block_forward.1} parent=35 // pred_fallthru
        _
    $region36: #{conv_block_forward.1} parent=5 // pred_fallthru
      _
    %p325 = scmp.le.s32.totalorder 2, %s10
    // Predicated region
    $region41: #{conv_block_forward.1} parent=5 // pred_check
      %p326 = pneg %p325
    $region42: #{conv_block_forward.1} parent=5 // pred_check_branch
      %328 = sbr.rel (%p326) target = $region44
    $region43: #{conv_block_forward.1} parent=5 // pred_region
      %s329 = ssub.s32 %s10, 2
      // Predicated region
      $region45: #{conv_block_forward.1} parent=43 // pred_check
        %p330 = pneg %p144
      $region46: #{conv_block_forward.1} parent=43 // pred_check_branch
        %332 = sbr.rel (%p330) target = $region48
      $region47: #{conv_block_forward.1} parent=43 // pred_region
        %s333 = smul.u32 2, %s22
        %p334 = scmp.lt.s32.totalorder %s21, 1
        %s335 = scalar_select %p334, %s21, 1
        %p336 = scmp.lt.s32.totalorder %s333, 1
        %s337 = scalar_select %p336, %s333, 1
        %s338 = smul.addr %s335, 2
        %s339 = sadd.s32 %s337, %s338
        %s340 = smul.addr %s339, 8
        %s341 = scalar_lea.vmem %s4, %s340
      $region48: #{conv_block_forward.1} parent=43 // pred_fallthru
        _
    $region44: #{conv_block_forward.1} parent=5 // pred_fallthru
      _
  $region6: #{conv_block_forward.1} parent=0 // loop_footer
    %s14 = sadd.s32 1, %s10
  $region7: #{conv_block_forward.1} parent=0 // loop_footer_branch
    %9 = sbr.rel target = $region3
  $region8: #{conv_block_forward.1} parent=0 // loop_exit
    _

</llo_original>
